<compile_context>
chip_gen: v5e
topology: v5e:2x2
jax: 0.10.0
libtpu: 0.0.40
codegen_flags: <defaults>
</compile_context>

<pallas_src>
import functools

import jax
import jax.numpy as jnp
import numpy as np
from jax.experimental import pallas as pl
from jax.experimental.pallas import tpu as pltpu

_BIG = 1e30  # distance assigned to padded (invalid) codebook rows


def _round_up(x, m):
    return ((x + m - 1) // m) * m


# ----------------------------------------------------------------------------
# Kernel 1: effective codebook + all grid-invariant precompute (one shot)
#   cb    = W_map @ weights + b[:, None]      (== weights_map(weights.T).T)
#   cbt   = -2 * cb.T  (distance dtype)       -- RHS of the distance matmul
#   c2    = ||cb||^2 per code, padded codes masked to +BIG
#   cb_hi / cb_lo : bf16 hi/lo split of cb so the hot kernel can select f32
#                   rows with two cheap bf16 MXU passes (~4e-6 rel error)
# ----------------------------------------------------------------------------
def _codebook_kernel(wmap_ref, w_ref, b_ref, cmask_ref,
                     cbt_ref, c2_ref, cbh_ref, cbl_ref):
    hp = jax.lax.Precision.HIGHEST
    cb = jnp.dot(wmap_ref[...], w_ref[...], precision=hp,
                 preferred_element_type=jnp.float32) + b_ref[...]
    cb_hi = cb.astype(jnp.bfloat16)
    cb_lo = (cb - cb_hi.astype(jnp.float32)).astype(jnp.bfloat16)
    cbh_ref[...] = cb_hi
    cbl_ref[...] = cb_lo

    cbt = cb.T                                             # one-time XLU transpose
    cbt_ref[...] = (-2.0 * cbt).astype(cbt_ref.dtype)      # fold -2 into the RHS
    c2 = jnp.sum(cbt * cbt, axis=0, keepdims=True)         # (1, n_e_p)
    c2_ref[...] = jnp.where(cmask_ref[...] > 0.5, c2, _BIG)


# ----------------------------------------------------------------------------
# Kernel 2: vector-quantization hot path on (TM, e_dim) row tiles
# ----------------------------------------------------------------------------
def _vq_kernel(z_ref, cbt_ref, c2_ref, cbh_ref, cbl_ref,
               zq_ref, oh_ref, idx_ref, cnt_ref, sq_ref, *,
               m_total, dist_precision):
    i = pl.program_id(0)
    tm = z_ref.shape[0]
    n_e_p = cbt_ref.shape[1]

    z = z_ref[...]                                          # (TM, e_dim) f32

    # distance up to the per-row constant ||z||^2 (argmin-invariant):
    #   d = ||cb||^2 - 2 z.cb       (single bf16 MXU pass on the perf path)
    zc = jnp.dot(z.astype(cbt_ref.dtype), cbt_ref[...],
                 precision=dist_precision,
                 preferred_element_type=jnp.float32)        # (TM, n_e_p)
    d = zc + c2_ref[...]

    # first-minimal index over the codebook axis (matches torch.argmin ties)
    d_min = jnp.min(d, axis=1, keepdims=True)               # (TM, 1)
    lane = jax.lax.broadcasted_iota(jnp.int32, d.shape, 1)
    idx_col = jnp.min(jnp.where(d == d_min, lane, n_e_p), axis=1, keepdims=True)
    idx_ref[...] = idx_col                                  # tiny int32 column store

    # one-hot built once in its store / matmul dtype (0 and 1 are exact in bf16)
    oh = (lane == idx_col).astype(jnp.bfloat16)             # (TM, n_e_p)
    oh_ref[...] = oh

    # z_q = selected f32 codebook rows via hi+lo bf16 MXU passes (f32 accumulate)
    zq = (jnp.dot(oh, cbh_ref[...], preferred_element_type=jnp.float32)
          + jnp.dot(oh, cbl_ref[...], preferred_element_type=jnp.float32))
    zq_ref[...] = zq

    # per-tile partial stats over *valid* rows only (tail rows are padding)
    row_id = i * tm + jax.lax.broadcasted_iota(jnp.int32, (1, tm), 1)
    valid_row = (row_id < m_total).astype(jnp.bfloat16)     # (1, TM), bf16 feed
    cnt_ref[...] = jnp.dot(valid_row, oh, preferred_element_type=jnp.float32)

    col_id = i * tm + jax.lax.broadcasted_iota(jnp.int32, (tm, 1), 0)
    diff2 = (zq - z) ** 2
    sq_ref[...] = jnp.sum(jnp.where(col_id < m_total, diff2, 0.0), keepdims=True)


# ----------------------------------------------------------------------------
# Tiling / VMEM budgeting (intermediate-aware, generation-aware)
# ----------------------------------------------------------------------------
def _vmem_capacity_bytes():
    try:
        cap = int(getattr(pltpu.get_tpu_info(), "vmem_capacity_bytes", 0))
        if cap > 0:
            return cap
    except Exception:
        pass
    return 128 * 2**20  # v5e/v6e default; v7x reports 64 MiB when queryable


def _vmem_estimate(tm, e_dim, n_e_p, dist_bytes):
    io_step = tm * (4 * e_dim          # z in (f32)
                    + 4 * e_dim        # z_q out (f32)
                    + 2 * n_e_p        # one-hot out (bf16)
                    + 4)               # idx out (int32 column)
    io_step += n_e_p * 4 + 4           # per-tile counts + sq partials
    invariant = n_e_p * (e_dim * dist_bytes   # -2 cb^T
                         + 4                  # ||cb||^2
                         + 2 * e_dim * 2)     # cb_hi + cb_lo (bf16)
    interm = tm * n_e_p * 16 + tm * e_dim * 12   # d / iota / one-hot / zq live values
    return 2 * (io_step + invariant) + interm    # double-buffered I/O + live temps


def _pick_tm(m, e_dim, n_e_p, dist_bytes, desired, budget):
    tm = max(128, min(_round_up(desired, 128), _round_up(m, 128)))
    while tm > 128 and _vmem_estimate(tm, e_dim, n_e_p, dist_bytes) > budget:
        tm -= 128
    if m > 128:  # keep >= 2 tiles so both v7x TensorCores get work
        tm = min(tm, max(128, _round_up((m + 1) // 2, 128)))
    return tm


# ----------------------------------------------------------------------------
# Wrapper matching PyTorch VectorQuantizer.forward (forward values only)
# ----------------------------------------------------------------------------
def vector_quantizer_forward(z_nchw, weights, w_map, b_map, beta, *,
                             tm=1024, distance_dtype=jnp.bfloat16):
    """Returns (loss, z_q_nchw, perplexity, min_encodings, min_encoding_indices).

    distance_dtype=bf16 feeds the distance matmul in bf16 (2x MXU throughput);
    exact near-ties may resolve to a different, equally-near code.  Use
    distance_dtype=float32 for bit-faithful argmin behavior.
    """
    N, C, H, W = z_nchw.shape
    e_dim = C
    n_e = w_map.shape[0]
    M = N * H * W

    # lane-align only the codebook axis (padded codes masked by +BIG distance);
    # the feature axis stays unpadded (full-dim blocks) -> less HBM traffic and
    # no bias contamination of distances / loss.
    n_e_p = _round_up(n_e, 128)

    w_map_p = jnp.pad(w_map.astype(jnp.float32), ((0, n_e_p - n_e), (0, 0)))
    b_p = jnp.pad(b_map.astype(jnp.float32), (0, n_e_p - n_e)).reshape(n_e_p, 1)
    cmask = (jnp.arange(n_e_p) < n_e).astype(jnp.float32).reshape(1, n_e_p)
    weights_f = weights.astype(jnp.float32)

    cbt_neg2, c2, cb_hi, cb_lo = pl.pallas_call(
        _codebook_kernel,
        out_shape=(
            jax.ShapeDtypeStruct((e_dim, n_e_p), distance_dtype),
            jax.ShapeDtypeStruct((1, n_e_p), jnp.float32),
            jax.ShapeDtypeStruct((n_e_p, e_dim), jnp.bfloat16),
            jax.ShapeDtypeStruct((n_e_p, e_dim), jnp.bfloat16),
        ),
    )(w_map_p, weights_f, b_p, cmask)

    dist_bytes = jnp.dtype(distance_dtype).itemsize
    capacity = _vmem_capacity_bytes()
    budget = int(0.4 * capacity)
    tm_eff = _pick_tm(M, e_dim, n_e_p, dist_bytes, tm, budget)
    g = int(pl.cdiv(M, tm_eff))
    m_pad = g * tm_eff

    # NCHW -> NHWC -> (M, e_dim), zero-pad rows up to the tile multiple (glue)
    z_flat = jnp.transpose(z_nchw, (0, 2, 3, 1)).reshape(M, e_dim).astype(jnp.float32)
    z_pad = jnp.pad(z_flat, ((0, m_pad - M), (0, 0)))

    est = _vmem_estimate(tm_eff, e_dim, n_e_p, dist_bytes)
    vmem_limit = int(min(int(0.9 * capacity), max(32 * 2**20, int(1.25 * est))))

    dist_precision = (jax.lax.Precision.HIGHEST
                      if jnp.dtype(distance_dtype) == jnp.dtype(jnp.float32)
                      else None)

    zq_p, oh_p, idx_p, cnt_p, sq_p = pl.pallas_call(
        functools.partial(_vq_kernel, m_total=M, dist_precision=dist_precision),
        grid=(g,),
        in_specs=[
            pl.BlockSpec((tm_eff, e_dim), lambda i: (i, 0)),      # z rows
            pl.BlockSpec((e_dim, n_e_p), lambda i: (0, 0)),       # -2 cb^T (invariant)
            pl.BlockSpec((1, n_e_p), lambda i: (0, 0)),           # ||cb||^2
            pl.BlockSpec((n_e_p, e_dim), lambda i: (0, 0)),       # cb hi (bf16)
            pl.BlockSpec((n_e_p, e_dim), lambda i: (0, 0)),       # cb lo (bf16)
        ],
        out_specs=[
            pl.BlockSpec((tm_eff, e_dim), lambda i: (i, 0)),      # z_q (f32)
            pl.BlockSpec((tm_eff, n_e_p), lambda i: (i, 0)),      # one-hot (bf16)
            pl.BlockSpec((tm_eff, 1), lambda i: (i, 0)),          # indices (int32)
            pl.BlockSpec((None, 1, n_e_p), lambda i: (i, 0, 0)),  # per-tile counts
            pl.BlockSpec((None, 1, 1), lambda i: (i, 0, 0)),      # per-tile sq-sum
        ],
        out_shape=(
            jax.ShapeDtypeStruct((m_pad, e_dim), jnp.float32),
            jax.ShapeDtypeStruct((m_pad, n_e_p), jnp.bfloat16),
            jax.ShapeDtypeStruct((m_pad, 1), jnp.int32),
            jax.ShapeDtypeStruct((g, 1, n_e_p), jnp.float32),
            jax.ShapeDtypeStruct((g, 1, 1), jnp.float32),
        ),
        compiler_params=pltpu.CompilerParams(
            dimension_semantics=("parallel",),   # stateless grid -> megacore friendly
            vmem_limit_bytes=vmem_limit,
        ),
    )(z_pad, cbt_neg2, c2, cb_hi, cb_lo)

    # un-pad + tiny final scalar math (glue)
    zq_flat = zq_p[:M]
    min_encodings = oh_p[:M, :n_e]          # bf16, values exactly 0/1
    min_idx = idx_p[:M]                     # (M, 1) int32
    counts = jnp.sum(cnt_p.reshape(g, n_e_p), axis=0)[:n_e]
    sq_sum = jnp.sum(sq_p)

    mse = sq_sum / (M * e_dim)
    # mean((zq.detach()-z)^2) + beta*mean((zq-z.detach())^2) == (1+beta)*mse in fwd
    loss = (1.0 + beta) * mse
    # straight-through: z_q = z + (z_q - z).detach()  -> numerically z_q
    z_q_nchw = jnp.transpose(zq_flat.reshape(N, H, W, e_dim), (0, 3, 1, 2))
    e_mean = counts / M
    perplexity = jnp.exp(-jnp.sum(e_mean * jnp.log(e_mean + 1e-10)))

    # TODO(synk): indices are int32 (PyTorch argmin returns int64) and
    # min_encodings is returned as bf16 (exact 0/1) instead of f32 to avoid an
    # extra full-tensor cast pass; cast lazily at the call site if needed.
    # TODO(synk): forward values only — straight-through / detach gradient
    # semantics are not represented if autodiff is applied to this wrapper.
    return loss, z_q_nchw, perplexity, min_encodings, min_idx


# ----------------------------------------------------------------------------
# Pure-JAX reference (for sanity check only)
# ----------------------------------------------------------------------------
def _ref_forward(z_nchw, weights, w_map, b_map, beta):
    hp = jax.lax.Precision.HIGHEST
    cb = jnp.dot(w_map, weights, precision=hp) + b_map[:, None]
    N, C, H, W = z_nchw.shape
    zf = jnp.transpose(z_nchw, (0, 2, 3, 1)).reshape(-1, C)
    d = (jnp.sum(zf**2, axis=1, keepdims=True) + jnp.sum(cb**2, axis=1)
         - 2.0 * jnp.dot(zf, cb.T, precision=hp))
    idx = jnp.argmin(d, axis=1)
    oh = jax.nn.one_hot(idx, cb.shape[0], dtype=jnp.float32)
    zq = jnp.dot(oh, cb, precision=hp)
    loss = (1.0 + beta) * jnp.mean((zq - zf) ** 2)
    zq_nchw = jnp.transpose(zq.reshape(N, H, W, C), (0, 3, 1, 2))
    e_mean = jnp.mean(oh, axis=0)
    perp = jnp.exp(-jnp.sum(e_mean * jnp.log(e_mean + 1e-10)))
    return loss, zq_nchw, perp, idx, cb, d


if __name__ == "__main__":
    # Small deterministic config. M = N*H*W = 200 is deliberately NOT a multiple
    # of 128 so the zero-padded / masked tail path is exercised.
    n_e, e_dim, w0, beta = 16, 8, 12, 0.25
    N, H, W = 2, 10, 10

    key = jax.random.PRNGKey(0)
    k1, k2, k3, k4 = jax.random.split(key, 4)
    weights = jax.random.normal(k1, (w0, e_dim), dtype=jnp.float32)    # self.weights
    w_map = jax.random.normal(k2, (n_e, w0), dtype=jnp.float32) * 0.2  # Linear weight
    b_map = jax.random.normal(k3, (n_e,), dtype=jnp.float32) * 0.1     # Linear bias
    z = jax.random.normal(k4, (N, e_dim, H, W), dtype=jnp.float32)

    r_loss, r_zq, r_perp, r_idx, r_cb, r_d = _ref_forward(z, weights, w_map, b_map, beta)

    # --- exactness check: f32-fed distances, small tile -> multi-tile grid + tail mask
    loss, z_q, perp, enc, idx = vector_quantizer_forward(
        z, weights, w_map, b_map, beta, tm=128, distance_dtype=jnp.float32)
    jax.block_until_ready((loss, z_q, perp, enc, idx))
    np.testing.assert_allclose(np.asarray(loss), np.asarray(r_loss), rtol=1e-4, atol=1e-4)
    np.testing.assert_allclose(np.asarray(z_q), np.asarray(r_zq), rtol=1e-4, atol=1e-4)
    np.testing.assert_allclose(np.asarray(perp), np.asarray(r_perp), rtol=1e-4, atol=1e-4)
    np.testing.assert_array_equal(np.asarray(idx)[:, 0], np.asarray(r_idx))
    np.testing.assert_array_equal(np.asarray(enc.astype(jnp.float32)),
                                  np.asarray(jax.nn.one_hot(r_idx, n_e)))

    # --- perf default: bf16-fed distance matmul (exact near-ties may legitimately flip)
    loss_b, zq_b, perp_b, enc_b, idx_b = vector_quantizer_forward(
        z, weights, w_map, b_map, beta)
    jax.block_until_ready((loss_b, zq_b, perp_b, enc_b, idx_b))
    idx_b = np.asarray(idx_b)[:, 0]
    d_np = np.asarray(r_d)
    d_sel = d_np[np.arange(d_np.shape[0]), idx_b]
    d_best = d_np.min(axis=1)
    assert np.all(d_sel <= d_best + 5e-2 * (np.abs(d_best) + 1.0)), \
        "bf16-fed argmin selected a clearly sub-optimal code"
    zq_b_flat = np.asarray(jnp.transpose(zq_b, (0, 2, 3, 1)).reshape(-1, e_dim))
    np.testing.assert_allclose(zq_b_flat, np.asarray(r_cb)[idx_b], rtol=1e-4, atol=1e-4)
    enc_b_f = np.asarray(enc_b.astype(jnp.float32))
    np.testing.assert_array_equal(enc_b_f.argmax(axis=1), idx_b)
    np.testing.assert_allclose(np.asarray(loss_b), np.asarray(r_loss), rtol=1e-1, atol=1e-1)
    np.testing.assert_allclose(np.asarray(perp_b), np.asarray(r_perp), rtol=1e-1, atol=1e-1)

    print("KERNEL_OK")
</pallas_src>

<mosaic_0001>
module attributes {stable_mosaic.version = 11 : i64} {
  func.func @_codebook_kernel(%arg0: memref<128x12xf32, #tpu.memory_space<vmem>>, %arg1: memref<12x8xf32, #tpu.memory_space<vmem>>, %arg2: memref<128x1xf32, #tpu.memory_space<vmem>>, %arg3: memref<1x128xf32, #tpu.memory_space<vmem>>, %arg4: memref<8x128xf32, #tpu.memory_space<vmem>>, %arg5: memref<1x128xf32, #tpu.memory_space<vmem>>, %arg6: memref<128x8xbf16, #tpu.memory_space<vmem>>, %arg7: memref<128x8xbf16, #tpu.memory_space<vmem>>) attributes {dimension_semantics = [], scalar_prefetch = 0 : i64, scratch_operands = 0 : i64, tpu.core_type = #tpu.core_type<tc>} {
    %c0 = arith.constant 0 : index
    %c0_0 = arith.constant 0 : index
    %0 = vector.load %arg0[%c0, %c0_0] : memref<128x12xf32, #tpu.memory_space<vmem>>, vector<128x12xf32>
    %c0_1 = arith.constant 0 : index
    %c0_2 = arith.constant 0 : index
    %1 = vector.load %arg1[%c0_1, %c0_2] : memref<12x8xf32, #tpu.memory_space<vmem>>, vector<12x8xf32>
    %cst = arith.constant dense<0.000000e+00> : vector<128x8xf32>
    %2 = tpu.matmul %0, %1, %cst {dimension_numbers = #tpu.dot_dimension_numbers<[1], [0], [0], [1], [0, 0, 1, 1], [], []>, precision = #tpu.contract_precision<fp32>} : vector<128x12xf32>, vector<12x8xf32>, vector<128x8xf32> -> vector<128x8xf32>
    %c0_3 = arith.constant 0 : index
    %c0_4 = arith.constant 0 : index
    %3 = vector.load %arg2[%c0_3, %c0_4] : memref<128x1xf32, #tpu.memory_space<vmem>>, vector<128x1xf32>
    %4 = vector.broadcast %3 : vector<128x1xf32> to vector<128x8xf32>
    %5 = arith.addf %2, %4 : vector<128x8xf32>
    %6 = arith.truncf %5 : vector<128x8xf32> to vector<128x8xbf16>
    %7 = arith.extf %6 : vector<128x8xbf16> to vector<128x8xf32>
    %8 = arith.subf %5, %7 : vector<128x8xf32>
    %9 = arith.truncf %8 : vector<128x8xf32> to vector<128x8xbf16>
    %c0_5 = arith.constant 0 : index
    %c0_6 = arith.constant 0 : index
    %10 = vector.load %arg6[%c0_5, %c0_6] : memref<128x8xbf16, #tpu.memory_space<vmem>>, vector<128x8xbf16>
    tpu.vector_store %arg6[%c0_5, %c0_6], %6 {strides = array<i32>} : memref<128x8xbf16, #tpu.memory_space<vmem>>, vector<128x8xbf16>,
    %c0_7 = arith.constant 0 : index
    %c0_8 = arith.constant 0 : index
    %11 = vector.load %arg7[%c0_7, %c0_8] : memref<128x8xbf16, #tpu.memory_space<vmem>>, vector<128x8xbf16>
    tpu.vector_store %arg7[%c0_7, %c0_8], %9 {strides = array<i32>} : memref<128x8xbf16, #tpu.memory_space<vmem>>, vector<128x8xbf16>,
    %12 = tpu.transpose %5, [1, 0] : vector<128x8xf32> -> vector<8x128xf32>
    %cst_9 = arith.constant -2.000000e+00 : f32
    %13 = vector.broadcast %cst_9 : f32 to vector<8x128xf32>
    %14 = arith.mulf %13, %12 : vector<8x128xf32>
    %c0_10 = arith.constant 0 : index
    %c0_11 = arith.constant 0 : index
    %15 = vector.load %arg4[%c0_10, %c0_11] : memref<8x128xf32, #tpu.memory_space<vmem>>, vector<8x128xf32>
    tpu.vector_store %arg4[%c0_10, %c0_11], %14 {strides = array<i32>} : memref<8x128xf32, #tpu.memory_space<vmem>>, vector<8x128xf32>,
    %16 = arith.mulf %12, %12 : vector<8x128xf32>
    %cst_12 = arith.constant dense<0.000000e+00> : vector<128xf32>
    %17 = vector.multi_reduction <add>, %16, %cst_12 [0] : vector<8x128xf32> to vector<128xf32>
    %18 = vector.shape_cast %17 : vector<128xf32> to vector<1x128xf32>
    %c0_13 = arith.constant 0 : index
    %c0_14 = arith.constant 0 : index
    %19 = vector.load %arg3[%c0_13, %c0_14] : memref<1x128xf32, #tpu.memory_space<vmem>>, vector<1x128xf32>
    %cst_15 = arith.constant 5.000000e-01 : f32
    %20 = vector.broadcast %cst_15 : f32 to vector<1x128xf32>
    %21 = arith.cmpf ogt, %19, %20 : vector<1x128xf32>
    %cst_16 = arith.constant 1.000000e+30 : f32
    %22 = vector.broadcast %cst_16 : f32 to vector<1x128xf32>
    %23 = arith.select %21, %18, %22 : vector<1x128xi1>, vector<1x128xf32>
    %c0_17 = arith.constant 0 : index
    %c0_18 = arith.constant 0 : index
    %24 = vector.load %arg5[%c0_17, %c0_18] : memref<1x128xf32, #tpu.memory_space<vmem>>, vector<1x128xf32>
    tpu.vector_store %arg5[%c0_17, %c0_18], %23 {strides = array<i32>} : memref<1x128xf32, #tpu.memory_space<vmem>>, vector<1x128xf32>,
    return
  }
}

</mosaic_0001>

<llo_original>
// kernel: tpu_custom_call.1
$region0: #{tpu_custom_call.1}
  #allocation0 [shape = 'u32[]', space=smem, size = 0x4, offset = 0x4, fixed_abs, tag = 'smem constant byte address 0x4 - core index']
  #allocation1 [shape = 'u32[72,128]{1,0:T(1,128)}', space=vmem, size = 0x9000, scoped, tag = 'internal scratch']
  %s0 = inlined_call_operand.vmem [shape: f32[128,12], index: 0, kind: input, shape index: {}]
  %s1 = inlined_call_operand.vmem [shape: f32[12,8], index: 1, kind: input, shape index: {}]
  %s2 = inlined_call_operand.vmem [shape: f32[128,1], index: 2, kind: input, shape index: {}]
  %s3 = inlined_call_operand.vmem [shape: f32[1,128], index: 3, kind: input, shape index: {}]
  %s4 = inlined_call_operand.hbm [shape: f32[8,128], index: 4, kind: output, shape index: {0}]
  %s5 = inlined_call_operand.hbm [shape: f32[1,128], index: 5, kind: output, shape index: {1}]
  %s6 = inlined_call_operand.vmem [shape: bf16[128,8], index: 6, kind: output, shape index: {2}]
  %s7 = inlined_call_operand.vmem [shape: bf16[128,8], index: 7, kind: output, shape index: {3}]
  %8 = xla_tuple %s4, %s5, %s6, %s7
  %s9 = sld [smem:[#allocation0]]
  $region50: #{tpu_custom_call.1} parent=0
    _
  %s11 = ssub.s32 1, %s9
  %s12 = scalar_select 0, %s11, %s9
  $region1: #{tpu_custom_call.1} parent=0
    #allocation2 [shape = 'u8[4096]{0}', space=vmem, size = 0x1000, scoped, tag = 'output window, operand 0, single buffered']
    #allocation3 [shape = 's32[1]{0}', space=sflag, size = 0x4, scoped, tag = 'scoped memory for tpu_custom_call.1']
    #allocation4 [shape = 'u8[512]{0}', space=vmem, size = 0x400, scoped, tag = 'output window, operand 1, single buffered']
    #allocation5 [shape = 's32[1]{0}', space=sflag, size = 0x4, scoped, tag = 'scoped memory for tpu_custom_call.1']
    %13 = vsyncpa [#allocation3], 0
    %14 = vsyncpa [#allocation5], 0
    // Predicated region
    $region2: #{tpu_custom_call.1} parent=1 // pred_check
      _
    $region3: #{tpu_custom_call.1} parent=1 // pred_check_branch
      %16 = sbr.rel (0) target = $region5
    $region4: #{tpu_custom_call.1} parent=1 // pred_region
      _
    $region5: #{tpu_custom_call.1} parent=1 // pred_fallthru
      _
    // Predicated region
    $region6: #{tpu_custom_call.1} parent=1 // pred_check
      _
    $region7: #{tpu_custom_call.1} parent=1 // pred_check_branch
      %18 = sbr.rel (0) target = $region9
    $region8: #{tpu_custom_call.1} parent=1 // pred_region
      _
    $region9: #{tpu_custom_call.1} parent=1 // pred_fallthru
      _
    // Predicated region
    $region10: #{tpu_custom_call.1} parent=1 // pred_check
      _
    $region11: #{tpu_custom_call.1} parent=1 // pred_check_branch
      %20 = sbr.rel (0) target = $region13
    $region12: #{tpu_custom_call.1} parent=1 // pred_region
      _
    $region13: #{tpu_custom_call.1} parent=1 // pred_fallthru
      _
    // Predicated region
    $region14: #{tpu_custom_call.1} parent=1 // pred_check
      _
    $region15: #{tpu_custom_call.1} parent=1 // pred_check_branch
      %22 = sbr.rel (0) target = $region17
    $region16: #{tpu_custom_call.1} parent=1 // pred_region
      _
    $region17: #{tpu_custom_call.1} parent=1 // pred_fallthru
      _
    %v23 = vld [vmem:[%s0] sm:$0xff]
    %v24 = vld [vmem:[%s0 + $0x8] sm:$0xff]
    %v25 = vld [vmem:[%s0 + $0x10] sm:$0xff]
    %v26 = vld [vmem:[%s0 + $0x18] sm:$0xff]
    %v27 = vld [vmem:[%s0 + $0x20] sm:$0xff]
    %v28 = vld [vmem:[%s0 + $0x28] sm:$0xff]
    %v29 = vld [vmem:[%s0 + $0x30] sm:$0xff]
    %v30 = vld [vmem:[%s0 + $0x38] sm:$0xff]
    %v31 = vld [vmem:[%s0 + $0x40] sm:$0xff]
    %v32 = vld [vmem:[%s0 + $0x48] sm:$0xff]
    %v33 = vld [vmem:[%s0 + $0x50] sm:$0xff]
    %v34 = vld [vmem:[%s0 + $0x58] sm:$0xff]
    %v35 = vld [vmem:[%s0 + $0x60] sm:$0xff]
    %v36 = vld [vmem:[%s0 + $0x68] sm:$0xff]
    %v37 = vld [vmem:[%s0 + $0x70] sm:$0xff]
    %v38 = vld [vmem:[%s0 + $0x78] sm:$0xff]
    %v39 = vld [vmem:[%s1] sm:$0xff]
    %v40 = vld [vmem:[%s1 + $0x8] sm:$0xf]
    %v41 = vld [vmem:[%s2] sm:$0xff]
    %v42 = vld [vmem:[%s2 + $0x8] sm:$0xff]
    %v43 = vld [vmem:[%s2 + $0x10] sm:$0xff]
    %v44 = vld [vmem:[%s2 + $0x18] sm:$0xff]
    %v45 = vld [vmem:[%s2 + $0x20] sm:$0xff]
    %v46 = vld [vmem:[%s2 + $0x28] sm:$0xff]
    %v47 = vld [vmem:[%s2 + $0x30] sm:$0xff]
    %v48 = vld [vmem:[%s2 + $0x38] sm:$0xff]
    %v49 = vld [vmem:[%s2 + $0x40] sm:$0xff]
    %v50 = vld [vmem:[%s2 + $0x48] sm:$0xff]
    %v51 = vld [vmem:[%s2 + $0x50] sm:$0xff]
    %v52 = vld [vmem:[%s2 + $0x58] sm:$0xff]
    %v53 = vld [vmem:[%s2 + $0x60] sm:$0xff]
    %v54 = vld [vmem:[%s2 + $0x68] sm:$0xff]
    %v55 = vld [vmem:[%s2 + $0x70] sm:$0xff]
    %v56 = vld [vmem:[%s2 + $0x78] sm:$0xff]
    %58 = vset.pattern.permute.xlu0 0
    %59 = vperm.xlu0 %58, %v41
    %v60 = vpop.permute.xlu0 %59
    %63 = vset.pattern.permute.xlu0 0
    %64 = vperm.xlu0 %63, %v42
    %v65 = vpop.permute.xlu0 %64
    %68 = vset.pattern.permute.xlu0 0
    %69 = vperm.xlu0 %68, %v43
    %v70 = vpop.permute.xlu0 %69
    %73 = vset.pattern.permute.xlu0 0
    %74 = vperm.xlu0 %73, %v44
    %v75 = vpop.permute.xlu0 %74
    %78 = vset.pattern.permute.xlu0 0
    %79 = vperm.xlu0 %78, %v45
    %v80 = vpop.permute.xlu0 %79
    %83 = vset.pattern.permute.xlu0 0
    %84 = vperm.xlu0 %83, %v46
    %v85 = vpop.permute.xlu0 %84
    %88 = vset.pattern.permute.xlu0 0
    %89 = vperm.xlu0 %88, %v47
    %v90 = vpop.permute.xlu0 %89
    %93 = vset.pattern.permute.xlu0 0
    %94 = vperm.xlu0 %93, %v48
    %v95 = vpop.permute.xlu0 %94
    %98 = vset.pattern.permute.xlu0 0
    %99 = vperm.xlu0 %98, %v49
    %v100 = vpop.permute.xlu0 %99
    %103 = vset.pattern.permute.xlu0 0
    %104 = vperm.xlu0 %103, %v50
    %v105 = vpop.permute.xlu0 %104
    %108 = vset.pattern.permute.xlu0 0
    %109 = vperm.xlu0 %108, %v51
    %v110 = vpop.permute.xlu0 %109
    %113 = vset.pattern.permute.xlu0 0
    %114 = vperm.xlu0 %113, %v52
    %v115 = vpop.permute.xlu0 %114
    %118 = vset.pattern.permute.xlu0 0
    %119 = vperm.xlu0 %118, %v53
    %v120 = vpop.permute.xlu0 %119
    %123 = vset.pattern.permute.xlu0 0
    %124 = vperm.xlu0 %123, %v54
    %v125 = vpop.permute.xlu0 %124
    %128 = vset.pattern.permute.xlu0 0
    %129 = vperm.xlu0 %128, %v55
    %v130 = vpop.permute.xlu0 %129
    %133 = vset.pattern.permute.xlu0 0
    %134 = vperm.xlu0 %133, %v56
    %v135 = vpop.permute.xlu0 %134
    %vm137 = vcmask 97280
    %v139 = vsel %vm137, %v23, 0
    %v142 = vsel %vm137, %v24, 0
    %v145 = vsel %vm137, %v25, 0
    %v148 = vsel %vm137, %v26, 0
    %v151 = vsel %vm137, %v27, 0
    %v154 = vsel %vm137, %v28, 0
    %v157 = vsel %vm137, %v29, 0
    %v160 = vsel %vm137, %v30, 0
    %v163 = vsel %vm137, %v31, 0
    %v166 = vsel %vm137, %v32, 0
    %v169 = vsel %vm137, %v33, 0
    %v172 = vsel %vm137, %v34, 0
    %v175 = vsel %vm137, %v35, 0
    %v178 = vsel %vm137, %v36, 0
    %v181 = vsel %vm137, %v37, 0
    %v184 = vsel %vm137, %v38, 0
    %vm186 = vcmask 1043456
    %v188 = vsel %vm186, %v40, 0
    %190 = vmatpush.msra.mxu0 0.0
    %191 = vmatpush.msra.mxu0 0.0
    %192 = vmatpush.msra.mxu0 0.0
    %193 = vmatpush.msra.mxu0 0.0
    %194 = vmatpush.msra.mxu0 0.0
    %195 = vmatpush.msra.mxu0 0.0
    %196 = vmatpush.msra.mxu0 0.0
    %197 = vmatpush.msra.mxu0 0.0
    %198 = vmatpush.msra.mxu0 0.0
    %199 = vmatpush.msra.mxu0 0.0
    %200 = vmatpush.msra.mxu0 0.0
    %201 = vmatpush.msra.mxu0 0.0
    %202 = vmatpush.msra.mxu0 0.0
    %203 = vmatpush.msra.mxu0 0.0
    %v204 = vand.u32 %v188, 4294901760
    %205 = vmatpush.msra.mxu0 %v204
    %v206 = vand.u32 %v39, 4294901760
    %207 = vmatpush.msra.mxu0 %v206
    %v208 = vand.u32 %v139, 4294901760
    %v209 = vsub.f32 %v139, %v208
    %v210 = vand.u32 %v209, 4294901760
    %v211 = vsub.f32 %v209, %v210
    %v212 = vand.u32 %v211, 4294901760
    %213 = vmatmul.f32.gmra.mxu0 %v212
    %v214 = vpop.f32.mrf.mxu0
    %v215 = vadd.f32 %v60, %v214
    %v216 = vand.u32 %v142, 4294901760
    %v217 = vsub.f32 %v142, %v216
    %v218 = vand.u32 %v217, 4294901760
    %v219 = vsub.f32 %v217, %v218
    %v220 = vand.u32 %v219, 4294901760
    %221 = vmatmul.f32.gmra.mxu0 %v220
    %v222 = vpop.f32.mrf.mxu0
    %v223 = vadd.f32 %v65, %v222
    %v224 = vand.u32 %v145, 4294901760
    %v225 = vsub.f32 %v145, %v224
    %v226 = vand.u32 %v225, 4294901760
    %v227 = vsub.f32 %v225, %v226
    %v228 = vand.u32 %v227, 4294901760
    %229 = vmatmul.f32.gmra.mxu0 %v228
    %v230 = vpop.f32.mrf.mxu0
    %v231 = vadd.f32 %v70, %v230
    %v232 = vand.u32 %v148, 4294901760
    %v233 = vsub.f32 %v148, %v232
    %v234 = vand.u32 %v233, 4294901760
    %v235 = vsub.f32 %v233, %v234
    %v236 = vand.u32 %v235, 4294901760
    %237 = vmatmul.f32.gmra.mxu0 %v236
    %v238 = vpop.f32.mrf.mxu0
    %v239 = vadd.f32 %v75, %v238
    %v240 = vand.u32 %v151, 4294901760
    %v241 = vsub.f32 %v151, %v240
    %v242 = vand.u32 %v241, 4294901760
    %v243 = vsub.f32 %v241, %v242
    %v244 = vand.u32 %v243, 4294901760
    %245 = vmatmul.f32.gmra.mxu0 %v244
    %v246 = vpop.f32.mrf.mxu0
    %v247 = vadd.f32 %v80, %v246
    %v248 = vand.u32 %v154, 4294901760
    %v249 = vsub.f32 %v154, %v248
    %v250 = vand.u32 %v249, 4294901760
    %v251 = vsub.f32 %v249, %v250
    %v252 = vand.u32 %v251, 4294901760
    %253 = vmatmul.f32.gmra.mxu0 %v252
    %v254 = vpop.f32.mrf.mxu0
    %v255 = vadd.f32 %v85, %v254
    %v256 = vand.u32 %v157, 4294901760
    %v257 = vsub.f32 %v157, %v256
    %v258 = vand.u32 %v257, 4294901760
    %v259 = vsub.f32 %v257, %v258
    %v260 = vand.u32 %v259, 4294901760
    %261 = vmatmul.f32.gmra.mxu0 %v260
    %v262 = vpop.f32.mrf.mxu0
    %v263 = vadd.f32 %v90, %v262
    %v264 = vand.u32 %v160, 4294901760
    %v265 = vsub.f32 %v160, %v264
    %v266 = vand.u32 %v265, 4294901760
    %v267 = vsub.f32 %v265, %v266
    %v268 = vand.u32 %v267, 4294901760
    %269 = vmatmul.f32.gmra.mxu0 %v268
    %v270 = vpop.f32.mrf.mxu0
    %v271 = vadd.f32 %v95, %v270
    %v272 = vand.u32 %v163, 4294901760
    %v273 = vsub.f32 %v163, %v272
    %v274 = vand.u32 %v273, 4294901760
    %v275 = vsub.f32 %v273, %v274
    %v276 = vand.u32 %v275, 4294901760
    %277 = vmatmul.f32.gmra.mxu0 %v276
    %v278 = vpop.f32.mrf.mxu0
    %v279 = vadd.f32 %v100, %v278
    %v280 = vand.u32 %v166, 4294901760
    %v281 = vsub.f32 %v166, %v280
    %v282 = vand.u32 %v281, 4294901760
    %v283 = vsub.f32 %v281, %v282
    %v284 = vand.u32 %v283, 4294901760
    %285 = vmatmul.f32.gmra.mxu0 %v284
    %v286 = vpop.f32.mrf.mxu0
    %v287 = vadd.f32 %v105, %v286
    %v288 = vand.u32 %v169, 4294901760
    %v289 = vsub.f32 %v169, %v288
    %v290 = vand.u32 %v289, 4294901760
    %v291 = vsub.f32 %v289, %v290
    %v292 = vand.u32 %v291, 4294901760
    %293 = vmatmul.f32.gmra.mxu0 %v292
    %v294 = vpop.f32.mrf.mxu0
    %v295 = vadd.f32 %v110, %v294
    %v296 = vand.u32 %v172, 4294901760
    %v297 = vsub.f32 %v172, %v296
    %v298 = vand.u32 %v297, 4294901760
    %v299 = vsub.f32 %v297, %v298
    %v300 = vand.u32 %v299, 4294901760
    %301 = vmatmul.f32.gmra.mxu0 %v300
    %v302 = vpop.f32.mrf.mxu0
    %v303 = vadd.f32 %v115, %v302
    %v304 = vand.u32 %v175, 4294901760
    %v305 = vsub.f32 %v175, %v304
    %v306 = vand.u32 %v305, 4294901760
    %v307 = vsub.f32 %v305, %v306
    %v308 = vand.u32 %v307, 4294901760
    %309 = vmatmul.f32.gmra.mxu0 %v308
    %v310 = vpop.f32.mrf.mxu0
    %v311 = vadd.f32 %v120, %v310
    %v312 = vand.u32 %v178, 4294901760
    %v313 = vsub.f32 %v178, %v312
    %v314 = vand.u32 %v313, 4294901760
    %v315 = vsub.f32 %v313, %v314
    %v316 = vand.u32 %v315, 4294901760
    %317 = vmatmul.f32.gmra.mxu0 %v316
    %v318 = vpop.f32.mrf.mxu0
    %v319 = vadd.f32 %v125, %v318
    %v320 = vand.u32 %v181, 4294901760
    %v321 = vsub.f32 %v181, %v320
    %v322 = vand.u32 %v321, 4294901760
    %v323 = vsub.f32 %v321, %v322
    %v324 = vand.u32 %v323, 4294901760
    %325 = vmatmul.f32.gmra.mxu0 %v324
    %v326 = vpop.f32.mrf.mxu0
    %v327 = vadd.f32 %v130, %v326
    %v328 = vand.u32 %v184, 4294901760
    %v329 = vsub.f32 %v184, %v328
    %v330 = vand.u32 %v329, 4294901760
    %v331 = vsub.f32 %v329, %v330
    %v332 = vand.u32 %v331, 4294901760
    %333 = vmatmul.f32.gmra.mxu0 %v332
    %v334 = vpop.f32.mrf.mxu0
    %v335 = vadd.f32 %v135, %v334
    %336 = vdwg.mxu0
    %337 = vmatpush.msra.mxu0 0.0
    %338 = vmatpush.msra.mxu0 0.0
    %339 = vmatpush.msra.mxu0 0.0
    %340 = vmatpush.msra.mxu0 0.0
    %341 = vmatpush.msra.mxu0 0.0
    %342 = vmatpush.msra.mxu0 0.0
    %343 = vmatpush.msra.mxu0 0.0
    %344 = vmatpush.msra.mxu0 0.0
    %345 = vmatpush.msra.mxu0 0.0
    %346 = vmatpush.msra.mxu0 0.0
    %347 = vmatpush.msra.mxu0 0.0
    %348 = vmatpush.msra.mxu0 0.0
    %349 = vmatpush.msra.mxu0 0.0
    %350 = vmatpush.msra.mxu0 0.0
    %v351 = vand.u32 %v188, 4294901760
    %v352 = vsub.f32 %v188, %v351
    %v353 = vand.u32 %v352, 4294901760
    %v354 = vsub.f32 %v352, %v353
    %v355 = vand.u32 %v354, 4294901760
    %356 = vmatpush.msra.mxu0 %v355
    %v357 = vand.u32 %v39, 4294901760
    %v358 = vsub.f32 %v39, %v357
    %v359 = vand.u32 %v358, 4294901760
    %v360 = vsub.f32 %v358, %v359
    %v361 = vand.u32 %v360, 4294901760
    %362 = vmatpush.msra.mxu0 %v361
    %v363 = vand.u32 %v139, 4294901760
    %364 = vmatmul.f32.gmra.mxu0 %v363
    %v365 = vpop.f32.mrf.mxu0
    %v366 = vadd.f32 %v215, %v365
    %v367 = vand.u32 %v142, 4294901760
    %368 = vmatmul.f32.gmra.mxu0 %v367
    %v369 = vpop.f32.mrf.mxu0
    %v370 = vadd.f32 %v223, %v369
    %v371 = vand.u32 %v145, 4294901760
    %372 = vmatmul.f32.gmra.mxu0 %v371
    %v373 = vpop.f32.mrf.mxu0
    %v374 = vadd.f32 %v231, %v373
    %v375 = vand.u32 %v148, 4294901760
    %376 = vmatmul.f32.gmra.mxu0 %v375
    %v377 = vpop.f32.mrf.mxu0
    %v378 = vadd.f32 %v239, %v377
    %v379 = vand.u32 %v151, 4294901760
    %380 = vmatmul.f32.gmra.mxu0 %v379
    %v381 = vpop.f32.mrf.mxu0
    %v382 = vadd.f32 %v247, %v381
    %v383 = vand.u32 %v154, 4294901760
    %384 = vmatmul.f32.gmra.mxu0 %v383
    %v385 = vpop.f32.mrf.mxu0
    %v386 = vadd.f32 %v255, %v385
    %v387 = vand.u32 %v157, 4294901760
    %388 = vmatmul.f32.gmra.mxu0 %v387
    %v389 = vpop.f32.mrf.mxu0
    %v390 = vadd.f32 %v263, %v389
    %v391 = vand.u32 %v160, 4294901760
    %392 = vmatmul.f32.gmra.mxu0 %v391
    %v393 = vpop.f32.mrf.mxu0
    %v394 = vadd.f32 %v271, %v393
    %v395 = vand.u32 %v163, 4294901760
    %396 = vmatmul.f32.gmra.mxu0 %v395
    %v397 = vpop.f32.mrf.mxu0
    %v398 = vadd.f32 %v279, %v397
    %v399 = vand.u32 %v166, 4294901760
    %400 = vmatmul.f32.gmra.mxu0 %v399
    %v401 = vpop.f32.mrf.mxu0
    %v402 = vadd.f32 %v287, %v401
    %v403 = vand.u32 %v169, 4294901760
    %404 = vmatmul.f32.gmra.mxu0 %v403
    %v405 = vpop.f32.mrf.mxu0
    %v406 = vadd.f32 %v295, %v405
    %v407 = vand.u32 %v172, 4294901760
    %408 = vmatmul.f32.gmra.mxu0 %v407
    %v409 = vpop.f32.mrf.mxu0
    %v410 = vadd.f32 %v303, %v409
    %v411 = vand.u32 %v175, 4294901760
    %412 = vmatmul.f32.gmra.mxu0 %v411
    %v413 = vpop.f32.mrf.mxu0
    %v414 = vadd.f32 %v311, %v413
    %v415 = vand.u32 %v178, 4294901760
    %416 = vmatmul.f32.gmra.mxu0 %v415
    %v417 = vpop.f32.mrf.mxu0
    %v418 = vadd.f32 %v319, %v417
    %v419 = vand.u32 %v181, 4294901760
    %420 = vmatmul.f32.gmra.mxu0 %v419
    %v421 = vpop.f32.mrf.mxu0
    %v422 = vadd.f32 %v327, %v421
    %v423 = vand.u32 %v184, 4294901760
    %424 = vmatmul.f32.gmra.mxu0 %v423
    %v425 = vpop.f32.mrf.mxu0
    %v426 = vadd.f32 %v335, %v425
    %427 = vdwg.mxu0
    %428 = vmatpush.msra.mxu0 0.0
    %429 = vmatpush.msra.mxu0 0.0
    %430 = vmatpush.msra.mxu0 0.0
    %431 = vmatpush.msra.mxu0 0.0
    %432 = vmatpush.msra.mxu0 0.0
    %433 = vmatpush.msra.mxu0 0.0
    %434 = vmatpush.msra.mxu0 0.0
    %435 = vmatpush.msra.mxu0 0.0
    %436 = vmatpush.msra.mxu0 0.0
    %437 = vmatpush.msra.mxu0 0.0
    %438 = vmatpush.msra.mxu0 0.0
    %439 = vmatpush.msra.mxu0 0.0
    %440 = vmatpush.msra.mxu0 0.0
    %441 = vmatpush.msra.mxu0 0.0
    %v442 = vand.u32 %v188, 4294901760
    %v443 = vsub.f32 %v188, %v442
    %444 = vmatpush.msra.mxu0 %v443
    %v445 = vand.u32 %v39, 4294901760
    %v446 = vsub.f32 %v39, %v445
    %447 = vmatpush.msra.mxu0 %v446
    %v448 = vand.u32 %v139, 4294901760
    %v449 = vsub.f32 %v139, %v448
    %450 = vmatmul.f32.gmra.mxu0 %v449
    %v451 = vpop.f32.mrf.mxu0
    %v452 = vadd.f32 %v366, %v451
    %v453 = vand.u32 %v142, 4294901760
    %v454 = vsub.f32 %v142, %v453
    %455 = vmatmul.f32.gmra.mxu0 %v454
    %v456 = vpop.f32.mrf.mxu0
    %v457 = vadd.f32 %v370, %v456
    %v458 = vand.u32 %v145, 4294901760
    %v459 = vsub.f32 %v145, %v458
    %460 = vmatmul.f32.gmra.mxu0 %v459
    %v461 = vpop.f32.mrf.mxu0
    %v462 = vadd.f32 %v374, %v461
    %v463 = vand.u32 %v148, 4294901760
    %v464 = vsub.f32 %v148, %v463
    %465 = vmatmul.f32.gmra.mxu0 %v464
    %v466 = vpop.f32.mrf.mxu0
    %v467 = vadd.f32 %v378, %v466
    %v468 = vand.u32 %v151, 4294901760
    %v469 = vsub.f32 %v151, %v468
    %470 = vmatmul.f32.gmra.mxu0 %v469
    %v471 = vpop.f32.mrf.mxu0
    %v472 = vadd.f32 %v382, %v471
    %v473 = vand.u32 %v154, 4294901760
    %v474 = vsub.f32 %v154, %v473
    %475 = vmatmul.f32.gmra.mxu0 %v474
    %v476 = vpop.f32.mrf.mxu0
    %v477 = vadd.f32 %v386, %v476
    %v478 = vand.u32 %v157, 4294901760
    %v479 = vsub.f32 %v157, %v478
    %480 = vmatmul.f32.gmra.mxu0 %v479
    %v481 = vpop.f32.mrf.mxu0
    %v482 = vadd.f32 %v390, %v481
    %v483 = vand.u32 %v160, 4294901760
    %v484 = vsub.f32 %v160, %v483
    %485 = vmatmul.f32.gmra.mxu0 %v484
    %v486 = vpop.f32.mrf.mxu0
    %v487 = vadd.f32 %v394, %v486
    %v488 = vand.u32 %v163, 4294901760
    %v489 = vsub.f32 %v163, %v488
    %490 = vmatmul.f32.gmra.mxu0 %v489
    %v491 = vpop.f32.mrf.mxu0
    %v492 = vadd.f32 %v398, %v491
    %v493 = vand.u32 %v166, 4294901760
    %v494 = vsub.f32 %v166, %v493
    %495 = vmatmul.f32.gmra.mxu0 %v494
    %v496 = vpop.f32.mrf.mxu0
    %v497 = vadd.f32 %v402, %v496
    %v498 = vand.u32 %v169, 4294901760
    %v499 = vsub.f32 %v169, %v498
    %500 = vmatmul.f32.gmra.mxu0 %v499
    %v501 = vpop.f32.mrf.mxu0
    %v502 = vadd.f32 %v406, %v501
    %v503 = vand.u32 %v172, 4294901760
    %v504 = vsub.f32 %v172, %v503
    %505 = vmatmul.f32.gmra.mxu0 %v504
    %v506 = vpop.f32.mrf.mxu0
    %v507 = vadd.f32 %v410, %v506
    %v508 = vand.u32 %v175, 4294901760
    %v509 = vsub.f32 %v175, %v508
    %510 = vmatmul.f32.gmra.mxu0 %v509
    %v511 = vpop.f32.mrf.mxu0
    %v512 = vadd.f32 %v414, %v511
    %v513 = vand.u32 %v178, 4294901760
    %v514 = vsub.f32 %v178, %v513
    %515 = vmatmul.f32.gmra.mxu0 %v514
    %v516 = vpop.f32.mrf.mxu0
    %v517 = vadd.f32 %v418, %v516
    %v518 = vand.u32 %v181, 4294901760
    %v519 = vsub.f32 %v181, %v518
    %520 = vmatmul.f32.gmra.mxu0 %v519
    %v521 = vpop.f32.mrf.mxu0
    %v522 = vadd.f32 %v422, %v521
    %v523 = vand.u32 %v184, 4294901760
    %v524 = vsub.f32 %v184, %v523
    %525 = vmatmul.f32.gmra.mxu0 %v524
    %v526 = vpop.f32.mrf.mxu0
    %v527 = vadd.f32 %v426, %v526
    %528 = vdwg.mxu0
    %529 = vmatpush.msra.mxu0 0.0
    %530 = vmatpush.msra.mxu0 0.0
    %531 = vmatpush.msra.mxu0 0.0
    %532 = vmatpush.msra.mxu0 0.0
    %533 = vmatpush.msra.mxu0 0.0
    %534 = vmatpush.msra.mxu0 0.0
    %535 = vmatpush.msra.mxu0 0.0
    %536 = vmatpush.msra.mxu0 0.0
    %537 = vmatpush.msra.mxu0 0.0
    %538 = vmatpush.msra.mxu0 0.0
    %539 = vmatpush.msra.mxu0 0.0
    %540 = vmatpush.msra.mxu0 0.0
    %541 = vmatpush.msra.mxu0 0.0
    %542 = vmatpush.msra.mxu0 0.0
    %v543 = vand.u32 %v188, 4294901760
    %544 = vmatpush.msra.mxu0 %v543
    %v545 = vand.u32 %v39, 4294901760
    %546 = vmatpush.msra.mxu0 %v545
    %v547 = vand.u32 %v139, 4294901760
    %v548 = vsub.f32 %v139, %v547
    %v549 = vand.u32 %v548, 4294901760
    %550 = vmatmul.f32.gmra.mxu0 %v549
    %v551 = vpop.f32.mrf.mxu0
    %v552 = vadd.f32 %v452, %v551
    %v553 = vand.u32 %v142, 4294901760
    %v554 = vsub.f32 %v142, %v553
    %v555 = vand.u32 %v554, 4294901760
    %556 = vmatmul.f32.gmra.mxu0 %v555
    %v557 = vpop.f32.mrf.mxu0
    %v558 = vadd.f32 %v457, %v557
    %v559 = vand.u32 %v145, 4294901760
    %v560 = vsub.f32 %v145, %v559
    %v561 = vand.u32 %v560, 4294901760
    %562 = vmatmul.f32.gmra.mxu0 %v561
    %v563 = vpop.f32.mrf.mxu0
    %v564 = vadd.f32 %v462, %v563
    %v565 = vand.u32 %v148, 4294901760
    %v566 = vsub.f32 %v148, %v565
    %v567 = vand.u32 %v566, 4294901760
    %568 = vmatmul.f32.gmra.mxu0 %v567
    %v569 = vpop.f32.mrf.mxu0
    %v570 = vadd.f32 %v467, %v569
    %v571 = vand.u32 %v151, 4294901760
    %v572 = vsub.f32 %v151, %v571
    %v573 = vand.u32 %v572, 4294901760
    %574 = vmatmul.f32.gmra.mxu0 %v573
    %v575 = vpop.f32.mrf.mxu0
    %v576 = vadd.f32 %v472, %v575
    %v577 = vand.u32 %v154, 4294901760
    %v578 = vsub.f32 %v154, %v577
    %v579 = vand.u32 %v578, 4294901760
    %580 = vmatmul.f32.gmra.mxu0 %v579
    %v581 = vpop.f32.mrf.mxu0
    %v582 = vadd.f32 %v477, %v581
    %v583 = vand.u32 %v157, 4294901760
    %v584 = vsub.f32 %v157, %v583
    %v585 = vand.u32 %v584, 4294901760
    %586 = vmatmul.f32.gmra.mxu0 %v585
    %v587 = vpop.f32.mrf.mxu0
    %v588 = vadd.f32 %v482, %v587
    %v589 = vand.u32 %v160, 4294901760
    %v590 = vsub.f32 %v160, %v589
    %v591 = vand.u32 %v590, 4294901760
    %592 = vmatmul.f32.gmra.mxu0 %v591
    %v593 = vpop.f32.mrf.mxu0
    %v594 = vadd.f32 %v487, %v593
    %v595 = vand.u32 %v163, 4294901760
    %v596 = vsub.f32 %v163, %v595
    %v597 = vand.u32 %v596, 4294901760
    %598 = vmatmul.f32.gmra.mxu0 %v597
    %v599 = vpop.f32.mrf.mxu0
    %v600 = vadd.f32 %v492, %v599
    %v601 = vand.u32 %v166, 4294901760
    %v602 = vsub.f32 %v166, %v601
    %v603 = vand.u32 %v602, 4294901760
    %604 = vmatmul.f32.gmra.mxu0 %v603
    %v605 = vpop.f32.mrf.mxu0
    %v606 = vadd.f32 %v497, %v605
    %v607 = vand.u32 %v169, 4294901760
    %v608 = vsub.f32 %v169, %v607
    %v609 = vand.u32 %v608, 4294901760
    %610 = vmatmul.f32.gmra.mxu0 %v609
    %v611 = vpop.f32.mrf.mxu0
    %v612 = vadd.f32 %v502, %v611
    %v613 = vand.u32 %v172, 4294901760
    %v614 = vsub.f32 %v172, %v613
    %v615 = vand.u32 %v614, 4294901760
    %616 = vmatmul.f32.gmra.mxu0 %v615
    %v617 = vpop.f32.mrf.mxu0
    %v618 = vadd.f32 %v507, %v617
    %v619 = vand.u32 %v175, 4294901760
    %v620 = vsub.f32 %v175, %v619
    %v621 = vand.u32 %v620, 4294901760
    %622 = vmatmul.f32.gmra.mxu0 %v621
    %v623 = vpop.f32.mrf.mxu0
    %v624 = vadd.f32 %v512, %v623
    %v625 = vand.u32 %v178, 4294901760
    %v626 = vsub.f32 %v178, %v625
    %v627 = vand.u32 %v626, 4294901760
    %628 = vmatmul.f32.gmra.mxu0 %v627
    %v629 = vpop.f32.mrf.mxu0
    %v630 = vadd.f32 %v517, %v629
    %v631 = vand.u32 %v181, 4294901760
    %v632 = vsub.f32 %v181, %v631
    %v633 = vand.u32 %v632, 4294901760
    %634 = vmatmul.f32.gmra.mxu0 %v633
    %v635 = vpop.f32.mrf.mxu0
    %v636 = vadd.f32 %v522, %v635
    %v637 = vand.u32 %v184, 4294901760
    %v638 = vsub.f32 %v184, %v637
    %v639 = vand.u32 %v638, 4294901760
    %640 = vmatmul.f32.gmra.mxu0 %v639
    %v641 = vpop.f32.mrf.mxu0
    %v642 = vadd.f32 %v527, %v641
    %643 = vdwg.mxu0
    %644 = vmatpush.msra.mxu0 0.0
    %645 = vmatpush.msra.mxu0 0.0
    %646 = vmatpush.msra.mxu0 0.0
    %647 = vmatpush.msra.mxu0 0.0
    %648 = vmatpush.msra.mxu0 0.0
    %649 = vmatpush.msra.mxu0 0.0
    %650 = vmatpush.msra.mxu0 0.0
    %651 = vmatpush.msra.mxu0 0.0
    %652 = vmatpush.msra.mxu0 0.0
    %653 = vmatpush.msra.mxu0 0.0
    %654 = vmatpush.msra.mxu0 0.0
    %655 = vmatpush.msra.mxu0 0.0
    %656 = vmatpush.msra.mxu0 0.0
    %657 = vmatpush.msra.mxu0 0.0
    %v658 = vand.u32 %v188, 4294901760
    %v659 = vsub.f32 %v188, %v658
    %v660 = vand.u32 %v659, 4294901760
    %661 = vmatpush.msra.mxu0 %v660
    %v662 = vand.u32 %v39, 4294901760
    %v663 = vsub.f32 %v39, %v662
    %v664 = vand.u32 %v663, 4294901760
    %665 = vmatpush.msra.mxu0 %v664
    %v666 = vand.u32 %v139, 4294901760
    %667 = vmatmul.f32.gmra.mxu0 %v666
    %v668 = vpop.f32.mrf.mxu0
    %v669 = vadd.f32 %v552, %v668
    %v670 = vand.u32 %v142, 4294901760
    %671 = vmatmul.f32.gmra.mxu0 %v670
    %v672 = vpop.f32.mrf.mxu0
    %v673 = vadd.f32 %v558, %v672
    %v674 = vand.u32 %v145, 4294901760
    %675 = vmatmul.f32.gmra.mxu0 %v674
    %v676 = vpop.f32.mrf.mxu0
    %v677 = vadd.f32 %v564, %v676
    %v678 = vand.u32 %v148, 4294901760
    %679 = vmatmul.f32.gmra.mxu0 %v678
    %v680 = vpop.f32.mrf.mxu0
    %v681 = vadd.f32 %v570, %v680
    %v682 = vand.u32 %v151, 4294901760
    %683 = vmatmul.f32.gmra.mxu0 %v682
    %v684 = vpop.f32.mrf.mxu0
    %v685 = vadd.f32 %v576, %v684
    %v686 = vand.u32 %v154, 4294901760
    %687 = vmatmul.f32.gmra.mxu0 %v686
    %v688 = vpop.f32.mrf.mxu0
    %v689 = vadd.f32 %v582, %v688
    %v690 = vand.u32 %v157, 4294901760
    %691 = vmatmul.f32.gmra.mxu0 %v690
    %v692 = vpop.f32.mrf.mxu0
    %v693 = vadd.f32 %v588, %v692
    %v694 = vand.u32 %v160, 4294901760
    %695 = vmatmul.f32.gmra.mxu0 %v694
    %v696 = vpop.f32.mrf.mxu0
    %v697 = vadd.f32 %v594, %v696
    %v698 = vand.u32 %v163, 4294901760
    %699 = vmatmul.f32.gmra.mxu0 %v698
    %v700 = vpop.f32.mrf.mxu0
    %v701 = vadd.f32 %v600, %v700
    %v702 = vand.u32 %v166, 4294901760
    %703 = vmatmul.f32.gmra.mxu0 %v702
    %v704 = vpop.f32.mrf.mxu0
    %v705 = vadd.f32 %v606, %v704
    %v706 = vand.u32 %v169, 4294901760
    %707 = vmatmul.f32.gmra.mxu0 %v706
    %v708 = vpop.f32.mrf.mxu0
    %v709 = vadd.f32 %v612, %v708
    %v710 = vand.u32 %v172, 4294901760
    %711 = vmatmul.f32.gmra.mxu0 %v710
    %v712 = vpop.f32.mrf.mxu0
    %v713 = vadd.f32 %v618, %v712
    %v714 = vand.u32 %v175, 4294901760
    %715 = vmatmul.f32.gmra.mxu0 %v714
    %v716 = vpop.f32.mrf.mxu0
    %v717 = vadd.f32 %v624, %v716
    %v718 = vand.u32 %v178, 4294901760
    %719 = vmatmul.f32.gmra.mxu0 %v718
    %v720 = vpop.f32.mrf.mxu0
    %v721 = vadd.f32 %v630, %v720
    %v722 = vand.u32 %v181, 4294901760
    %723 = vmatmul.f32.gmra.mxu0 %v722
    %v724 = vpop.f32.mrf.mxu0
    %v725 = vadd.f32 %v636, %v724
    %v726 = vand.u32 %v184, 4294901760
    %727 = vmatmul.f32.gmra.mxu0 %v726
    %v728 = vpop.f32.mrf.mxu0
    %v729 = vadd.f32 %v642, %v728
    %730 = vdwg.mxu0
    %731 = vmatpush.msra.mxu0 0.0
    %732 = vmatpush.msra.mxu0 0.0
    %733 = vmatpush.msra.mxu0 0.0
    %734 = vmatpush.msra.mxu0 0.0
    %735 = vmatpush.msra.mxu0 0.0
    %736 = vmatpush.msra.mxu0 0.0
    %737 = vmatpush.msra.mxu0 0.0
    %738 = vmatpush.msra.mxu0 0.0
    %739 = vmatpush.msra.mxu0 0.0
    %740 = vmatpush.msra.mxu0 0.0
    %741 = vmatpush.msra.mxu0 0.0
    %742 = vmatpush.msra.mxu0 0.0
    %743 = vmatpush.msra.mxu0 0.0
    %744 = vmatpush.msra.mxu0 0.0
    %v745 = vand.u32 %v188, 4294901760
    %746 = vmatpush.msra.mxu0 %v745
    %v747 = vand.u32 %v39, 4294901760
    %748 = vmatpush.msra.mxu0 %v747
    %v749 = vand.u32 %v139, 4294901760
    %750 = vmatmul.f32.gmra.mxu0 %v749
    %v751 = vpop.f32.mrf.mxu0
    %v752 = vadd.f32 %v669, %v751
    %v753 = vand.u32 %v142, 4294901760
    %754 = vmatmul.f32.gmra.mxu0 %v753
    %v755 = vpop.f32.mrf.mxu0
    %v756 = vadd.f32 %v673, %v755
    %v757 = vand.u32 %v145, 4294901760
    %758 = vmatmul.f32.gmra.mxu0 %v757
    %v759 = vpop.f32.mrf.mxu0
    %v760 = vadd.f32 %v677, %v759
    %v761 = vand.u32 %v148, 4294901760
    %762 = vmatmul.f32.gmra.mxu0 %v761
    %v763 = vpop.f32.mrf.mxu0
    %v764 = vadd.f32 %v681, %v763
    %v765 = vand.u32 %v151, 4294901760
    %766 = vmatmul.f32.gmra.mxu0 %v765
    %v767 = vpop.f32.mrf.mxu0
    %v768 = vadd.f32 %v685, %v767
    %v769 = vand.u32 %v154, 4294901760
    %770 = vmatmul.f32.gmra.mxu0 %v769
    %v771 = vpop.f32.mrf.mxu0
    %v772 = vadd.f32 %v689, %v771
    %v773 = vand.u32 %v157, 4294901760
    %774 = vmatmul.f32.gmra.mxu0 %v773
    %v775 = vpop.f32.mrf.mxu0
    %v776 = vadd.f32 %v693, %v775
    %v777 = vand.u32 %v160, 4294901760
    %778 = vmatmul.f32.gmra.mxu0 %v777
    %v779 = vpop.f32.mrf.mxu0
    %v780 = vadd.f32 %v697, %v779
    %v781 = vand.u32 %v163, 4294901760
    %782 = vmatmul.f32.gmra.mxu0 %v781
    %v783 = vpop.f32.mrf.mxu0
    %v784 = vadd.f32 %v701, %v783
    %v785 = vand.u32 %v166, 4294901760
    %786 = vmatmul.f32.gmra.mxu0 %v785
    %v787 = vpop.f32.mrf.mxu0
    %v788 = vadd.f32 %v705, %v787
    %v789 = vand.u32 %v169, 4294901760
    %790 = vmatmul.f32.gmra.mxu0 %v789
    %v791 = vpop.f32.mrf.mxu0
    %v792 = vadd.f32 %v709, %v791
    %v793 = vand.u32 %v172, 4294901760
    %794 = vmatmul.f32.gmra.mxu0 %v793
    %v795 = vpop.f32.mrf.mxu0
    %v796 = vadd.f32 %v713, %v795
    %v797 = vand.u32 %v175, 4294901760
    %798 = vmatmul.f32.gmra.mxu0 %v797
    %v799 = vpop.f32.mrf.mxu0
    %v800 = vadd.f32 %v717, %v799
    %v801 = vand.u32 %v178, 4294901760
    %802 = vmatmul.f32.gmra.mxu0 %v801
    %v803 = vpop.f32.mrf.mxu0
    %v804 = vadd.f32 %v721, %v803
    %v805 = vand.u32 %v181, 4294901760
    %806 = vmatmul.f32.gmra.mxu0 %v805
    %v807 = vpop.f32.mrf.mxu0
    %v808 = vadd.f32 %v725, %v807
    %v809 = vand.u32 %v184, 4294901760
    %810 = vmatmul.f32.gmra.mxu0 %v809
    %v811 = vpop.f32.mrf.mxu0
    %v812 = vadd.f32 %v729, %v811
    %813 = vdwg.mxu0
    %v814 = vpack.c.bf16 %v752, %v752
    %v815 = vpack.c.bf16 %v756, %v756
    %v816 = vpack.c.bf16 %v760, %v760
    %v817 = vpack.c.bf16 %v764, %v764
    %v818 = vpack.c.bf16 %v768, %v768
    %v819 = vpack.c.bf16 %v772, %v772
    %v820 = vpack.c.bf16 %v776, %v776
    %v821 = vpack.c.bf16 %v780, %v780
    %v822 = vpack.c.bf16 %v784, %v784
    %v823 = vpack.c.bf16 %v788, %v788
    %v824 = vpack.c.bf16 %v792, %v792
    %v825 = vpack.c.bf16 %v796, %v796
    %v826 = vpack.c.bf16 %v800, %v800
    %v827 = vpack.c.bf16 %v804, %v804
    %v828 = vpack.c.bf16 %v808, %v808
    %v829 = vpack.c.bf16 %v812, %v812
    %v830 = vunpack.c.l.bf16 %v814
    %v831 = vunpack.c.l.bf16 %v815
    %v832 = vunpack.c.l.bf16 %v816
    %v833 = vunpack.c.l.bf16 %v817
    %v834 = vunpack.c.l.bf16 %v818
    %v835 = vunpack.c.l.bf16 %v819
    %v836 = vunpack.c.l.bf16 %v820
    %v837 = vunpack.c.l.bf16 %v821
    %v838 = vunpack.c.l.bf16 %v822
    %v839 = vunpack.c.l.bf16 %v823
    %v840 = vunpack.c.l.bf16 %v824
    %v841 = vunpack.c.l.bf16 %v825
    %v842 = vunpack.c.l.bf16 %v826
    %v843 = vunpack.c.l.bf16 %v827
    %v844 = vunpack.c.l.bf16 %v828
    %v845 = vunpack.c.l.bf16 %v829
    %v846 = vsub.f32 %v752, %v830
    %v847 = vsub.f32 %v756, %v831
    %v848 = vsub.f32 %v760, %v832
    %v849 = vsub.f32 %v764, %v833
    %v850 = vsub.f32 %v768, %v834
    %v851 = vsub.f32 %v772, %v835
    %v852 = vsub.f32 %v776, %v836
    %v853 = vsub.f32 %v780, %v837
    %v854 = vsub.f32 %v784, %v838
    %v855 = vsub.f32 %v788, %v839
    %v856 = vsub.f32 %v792, %v840
    %v857 = vsub.f32 %v796, %v841
    %v858 = vsub.f32 %v800, %v842
    %v859 = vsub.f32 %v804, %v843
    %v860 = vsub.f32 %v808, %v844
    %v861 = vsub.f32 %v812, %v845
    %v862 = vpack.c.bf16 %v846, %v846
    %v863 = vpack.c.bf16 %v847, %v847
    %v864 = vpack.c.bf16 %v848, %v848
    %v865 = vpack.c.bf16 %v849, %v849
    %v866 = vpack.c.bf16 %v850, %v850
    %v867 = vpack.c.bf16 %v851, %v851
    %v868 = vpack.c.bf16 %v852, %v852
    %v869 = vpack.c.bf16 %v853, %v853
    %v870 = vpack.c.bf16 %v854, %v854
    %v871 = vpack.c.bf16 %v855, %v855
    %v872 = vpack.c.bf16 %v856, %v856
    %v873 = vpack.c.bf16 %v857, %v857
    %v874 = vpack.c.bf16 %v858, %v858
    %v875 = vpack.c.bf16 %v859, %v859
    %v876 = vpack.c.bf16 %v860, %v860
    %v877 = vpack.c.bf16 %v861, %v861
    %vm878 = vcmask 60416
    %879 = vst.msk [vmem:[%s6] sm:$0xf] %vm878, %v814
    %880 = vst.msk [vmem:[%s6 + $0x4] sm:$0xf] %vm878, %v815
    %881 = vst.msk [vmem:[%s6 + $0x8] sm:$0xf] %vm878, %v816
    %882 = vst.msk [vmem:[%s6 + $0xc] sm:$0xf] %vm878, %v817
    %883 = vst.msk [vmem:[%s6 + $0x10] sm:$0xf] %vm878, %v818
    %884 = vst.msk [vmem:[%s6 + $0x14] sm:$0xf] %vm878, %v819
    %885 = vst.msk [vmem:[%s6 + $0x18] sm:$0xf] %vm878, %v820
    %886 = vst.msk [vmem:[%s6 + $0x1c] sm:$0xf] %vm878, %v821
    %887 = vst.msk [vmem:[%s6 + $0x20] sm:$0xf] %vm878, %v822
    %888 = vst.msk [vmem:[%s6 + $0x24] sm:$0xf] %vm878, %v823
    %889 = vst.msk [vmem:[%s6 + $0x28] sm:$0xf] %vm878, %v824
    %890 = vst.msk [vmem:[%s6 + $0x2c] sm:$0xf] %vm878, %v825
    %891 = vst.msk [vmem:[%s6 + $0x30] sm:$0xf] %vm878, %v826
    %892 = vst.msk [vmem:[%s6 + $0x34] sm:$0xf] %vm878, %v827
    %893 = vst.msk [vmem:[%s6 + $0x38] sm:$0xf] %vm878, %v828
    %894 = vst.msk [vmem:[%s6 + $0x3c] sm:$0xf] %vm878, %v829
    %895 = vst.msk [vmem:[%s7] sm:$0xf] %vm878, %v862
    %896 = vst.msk [vmem:[%s7 + $0x4] sm:$0xf] %vm878, %v863
    %897 = vst.msk [vmem:[%s7 + $0x8] sm:$0xf] %vm878, %v864
    %898 = vst.msk [vmem:[%s7 + $0xc] sm:$0xf] %vm878, %v865
    %899 = vst.msk [vmem:[%s7 + $0x10] sm:$0xf] %vm878, %v866
    %900 = vst.msk [vmem:[%s7 + $0x14] sm:$0xf] %vm878, %v867
    %901 = vst.msk [vmem:[%s7 + $0x18] sm:$0xf] %vm878, %v868
    %902 = vst.msk [vmem:[%s7 + $0x1c] sm:$0xf] %vm878, %v869
    %903 = vst.msk [vmem:[%s7 + $0x20] sm:$0xf] %vm878, %v870
    %904 = vst.msk [vmem:[%s7 + $0x24] sm:$0xf] %vm878, %v871
    %905 = vst.msk [vmem:[%s7 + $0x28] sm:$0xf] %vm878, %v872
    %906 = vst.msk [vmem:[%s7 + $0x2c] sm:$0xf] %vm878, %v873
    %907 = vst.msk [vmem:[%s7 + $0x30] sm:$0xf] %vm878, %v874
    %908 = vst.msk [vmem:[%s7 + $0x34] sm:$0xf] %vm878, %v875
    %909 = vst.msk [vmem:[%s7 + $0x38] sm:$0xf] %vm878, %v876
    %910 = vst.msk [vmem:[%s7 + $0x3c] sm:$0xf] %vm878, %v877
    %911 = vxpose.xlu0.b32.start [1/16] %v752, 128
    %912 = vxpose.xlu0.b32.cont [2/16] %v756, 128
    %913 = vxpose.xlu0.b32.cont [3/16] %v760, 128
    %914 = vxpose.xlu0.b32.cont [4/16] %v764, 128
    %915 = vxpose.xlu0.b32.cont [5/16] %v768, 128
    %916 = vxpose.xlu0.b32.cont [6/16] %v772, 128
    %917 = vxpose.xlu0.b32.cont [7/16] %v776, 128
    %918 = vxpose.xlu0.b32.cont [8/16] %v780, 128
    %919 = vxpose.xlu0.b32.cont [9/16] %v784, 128
    %920 = vxpose.xlu0.b32.cont [10/16] %v788, 128
    %921 = vxpose.xlu0.b32.cont [11/16] %v792, 128
    %922 = vxpose.xlu0.b32.cont [12/16] %v796, 128
    %923 = vxpose.xlu0.b32.cont [13/16] %v800, 128
    %924 = vxpose.xlu0.b32.cont [14/16] %v804, 128
    %925 = vxpose.xlu0.b32.cont [15/16] %v808, 128
    %926 = vxpose.xlu0.b32.end [16/16] %v812, 128
    %v927 = vpop.trf.xlu0
    %v928 = vpop.trf.xlu0
    %v929 = vpop.trf.xlu0
    %v930 = vpop.trf.xlu0
    %v931 = vpop.trf.xlu0
    %v932 = vpop.trf.xlu0
    %v933 = vpop.trf.xlu0
    %v934 = vpop.trf.xlu0
    %v935 = vpop.trf.xlu0
    %v936 = vpop.trf.xlu0
    %v937 = vpop.trf.xlu0
    %v938 = vpop.trf.xlu0
    %v939 = vpop.trf.xlu0
    %v940 = vpop.trf.xlu0
    %v941 = vpop.trf.xlu0
    %v942 = vpop.trf.xlu0
    %v943 = vmul.f32 %v927, -2.0
    %944 = vst [vmem:[#allocation2] sm:$0xff] %v943
    %v945 = vmul.f32 %v927, %v927
    %v946 = vrot.slane %v945, 4
    %v947 = vadd.f32 %v945, %v946
    %v948 = vrot.slane %v947, 2
    %v949 = vadd.f32 %v947, %v948
    %v950 = vrot.slane %v949, 1
    %v951 = vadd.f32 %v949, %v950
    %v952 = vld [vmem:[%s3] sm:$0x1]
    %vm953 = vcmp.gt.f32.partialorder %v952, 0.5
    %v954 = vsel %vm953, %v951, 1e+30
    %955 = vst [vmem:[#allocation4] sm:$0x1] %v954
    // Predicated region
    $region18: #{tpu_custom_call.1} parent=1 // pred_check
      _
    $region19: #{tpu_custom_call.1} parent=1 // pred_check_branch
      %957 = sbr.rel (0) target = $region21
    $region20: #{tpu_custom_call.1} parent=1 // pred_region
      %959 = vsyncadd [#allocation3], 0
      %s961 = sshll.u32 [#allocation2], 4
      %s962 = int_to_ptr.vmem [resolvable:$true] %s961
      %s963 = sshll.u32 %s4, 4
      %s964 = int_to_ptr.hbm [resolvable:$true] %s963
      %966 = dma.vmem_to_hbm [thread:$0]  %s962, 128, %s964, [#allocation3]
    $region21: #{tpu_custom_call.1} parent=1 // pred_fallthru
      _
    // Predicated region
    $region22: #{tpu_custom_call.1} parent=1 // pred_check
      _
    $region23: #{tpu_custom_call.1} parent=1 // pred_check_branch
      %968 = sbr.rel (0) target = $region25
    $region24: #{tpu_custom_call.1} parent=1 // pred_region
      %970 = vsyncadd [#allocation5], 0
      %s972 = sshll.u32 [#allocation4], 4
      %s973 = int_to_ptr.vmem [resolvable:$true] %s972
      %s974 = sshll.u32 %s5, 4
      %s975 = int_to_ptr.hbm [resolvable:$true] %s974
      %977 = dma.vmem_to_hbm [thread:$0]  %s973, 16, %s975, [#allocation5]
    $region25: #{tpu_custom_call.1} parent=1 // pred_fallthru
      _
    // Predicated region
    $region26: #{tpu_custom_call.1} parent=1 // pred_check
      _
    $region27: #{tpu_custom_call.1} parent=1 // pred_check_branch
      %979 = sbr.rel (0) target = $region29
    $region28: #{tpu_custom_call.1} parent=1 // pred_region
      _
    $region29: #{tpu_custom_call.1} parent=1 // pred_fallthru
      _
    // Predicated region
    $region30: #{tpu_custom_call.1} parent=1 // pred_check
      _
    $region31: #{tpu_custom_call.1} parent=1 // pred_check_branch
      %981 = sbr.rel (0) target = $region33
    $region32: #{tpu_custom_call.1} parent=1 // pred_region
      _
    $region33: #{tpu_custom_call.1} parent=1 // pred_fallthru
      _
    // Predicated region
    $region34: #{tpu_custom_call.1} parent=1 // pred_check
      _
    $region35: #{tpu_custom_call.1} parent=1 // pred_check_branch
      %983 = sbr.rel (0) target = $region37
    $region36: #{tpu_custom_call.1} parent=1 // pred_region
      %985 = dma.done [#allocation3], 128
    $region37: #{tpu_custom_call.1} parent=1 // pred_fallthru
      _
    // Predicated region
    $region38: #{tpu_custom_call.1} parent=1 // pred_check
      _
    $region39: #{tpu_custom_call.1} parent=1 // pred_check_branch
      %987 = sbr.rel (0) target = $region41
    $region40: #{tpu_custom_call.1} parent=1 // pred_region
      %989 = dma.done [#allocation5], 16
    $region41: #{tpu_custom_call.1} parent=1 // pred_fallthru
      _
    // Predicated region
    $region42: #{tpu_custom_call.1} parent=1 // pred_check
      _
    $region43: #{tpu_custom_call.1} parent=1 // pred_check_branch
      %991 = sbr.rel (0) target = $region45
    $region44: #{tpu_custom_call.1} parent=1 // pred_region
      _
    $region45: #{tpu_custom_call.1} parent=1 // pred_fallthru
      _
    // Predicated region
    $region46: #{tpu_custom_call.1} parent=1 // pred_check
      _
    $region47: #{tpu_custom_call.1} parent=1 // pred_check_branch
      %993 = sbr.rel (0) target = $region49
    $region48: #{tpu_custom_call.1} parent=1 // pred_region
      _
    $region49: #{tpu_custom_call.1} parent=1 // pred_fallthru
      _
    %994 = vsyncpa [#allocation3], 1
    %995 = vsyncpa [#allocation5], 1

</llo_original>
